<compile_context>
chip_gen: v5e
topology: v5e:2x2
jax: 0.10.0
libtpu: 0.0.40
codegen_flags: <defaults>
</compile_context>

<pallas_src>
import functools

import jax
import jax.numpy as jnp
from jax.experimental import pallas as pl
from jax.experimental.pallas import tpu as pltpu


def _round_up(x, m):
    return ((x + m - 1) // m) * m


def _dice_partial_kernel(x_ref, t_ref, i_ref, z_ref, y_ref, *,
                         use_softmax, hw, tile_n, chunk_n, nt_total, nt_inner,
                         needs_mask, unroll):
    """One (batch b, split s, pixel-tile n) grid step.

    x_ref : (C, tile_n) logits tile (native dtype; cast to f32 per chunk)
    t_ref : (1, tile_n) int32 labels tile
    i_ref / z_ref / y_ref : (C, fold_w) f32 lane-parallel per-class partial sums
        (intersect, sum(score^2), per-class pixel count) for this (b, s); they
        stay resident in VMEM across the inner ("arbitrary") pixel-tile axis.
    """
    s = pl.program_id(1)
    n = pl.program_id(2)

    @pl.when(n == 0)
    def _init():
        i_ref[...] = jnp.zeros_like(i_ref)
        z_ref[...] = jnp.zeros_like(z_ref)
        y_ref[...] = jnp.zeros_like(y_ref)

    c = x_ref.shape[0]
    n_chunks = tile_n // chunk_n
    fold_w = min(128, chunk_n)
    n_folds = chunk_n // fold_w

    # Hoisted loop-invariant constants (JAX does not CSE broadcast_in_dim).
    cls_iota = jax.lax.broadcasted_iota(jnp.int32, (c, chunk_n), 0)
    lane_iota = jax.lax.broadcasted_iota(jnp.int32, (1, chunk_n), 1)

    g_tile = s * nt_inner + n                  # global pixel-tile index
    tile_col0 = g_tile * tile_n                # first pixel column of this tile

    def lane_fold(a):
        """(C, chunk_n) -> (C, fold_w) lane-parallel partial sums.

        Vreg-aligned slice+add only; avoids the per-chunk intra-vreg cross-lane
        XLU reduce (and 1-lane masked stores) a full jnp.sum(axis=1) would emit.
        """
        r = a[:, 0:fold_w]
        for j in range(1, n_folds):
            r = r + a[:, j * fold_w:(j + 1) * fold_w]
        return r

    def chunk_body(ci, masked):
        if chunk_n % 128 == 0:
            off = pl.multiple_of(ci * chunk_n, 128)
        else:
            off = ci * chunk_n                 # tiny single-chunk case only
        xc = x_ref[:, pl.ds(off, chunk_n)].astype(jnp.float32)
        tc = t_ref[:, pl.ds(off, chunk_n)]
        if masked:
            # OOB-padded columns of the tail tile hold garbage: sanitize before
            # exp AND zero every contribution afterwards (both are required).
            valid = (tile_col0 + off + lane_iota) < hw          # (1, chunk_n)
            xc = jnp.where(valid, xc, 0.0)
        if use_softmax:
            xc = xc - jnp.max(xc, axis=0, keepdims=True)
            ex = jnp.exp(xc)
            xc = ex * pl.reciprocal(jnp.sum(ex, axis=0, keepdims=True),
                                    approx=True)
        hit = cls_iota == tc                                    # (C, chunk_n)
        if masked:
            xc = jnp.where(valid, xc, 0.0)     # kill padded softmax columns
            hit = jnp.logical_and(hit, valid)
        sel = jnp.where(hit, xc, 0.0)          # score * onehot without mul/convert
        onehot = jnp.where(hit, 1.0, 0.0)
        i_ref[...] += lane_fold(sel)
        z_ref[...] += lane_fold(xc * xc)
        y_ref[...] += lane_fold(onehot)        # onehot^2 == onehot

    def run(masked):
        def body(ci, carry):
            chunk_body(ci, masked)
            return carry
        jax.lax.fori_loop(0, n_chunks, body, 0, unroll=unroll)

    if needs_mask:
        @pl.when(g_tile < nt_total - 1)
        def _full_tiles():
            run(False)

        @pl.when(g_tile == nt_total - 1)
        def _tail_tile():
            run(True)
    else:
        run(False)


def dice_loss(logits, target, weight=None, *, softmax=True,
              tile_n_cap=65536, chunk_n_cap=1024):
    """DiceLoss.forward equivalent.

    logits: (B, C, H, W), any float dtype (kept native; cast in-kernel)
    target: (B, H, W) integer class labels in [0, C)
    weight: optional per-class weights (length C); defaults to all ones
    """
    B, C, H, W = logits.shape
    HW = H * W
    itemsize = jnp.dtype(logits.dtype).itemsize

    x = logits.reshape(B, C, HW)                       # free reshape of NCHW
    t = jnp.asarray(target).reshape(B, 1, HW)
    if t.dtype != jnp.int32:
        t = t.astype(jnp.int32)

    # --- chunk_n: pixels per inner compute step.  Bounded so the ~6 live f32
    # (C, chunk_n) temporaries stay inside the 64-vreg register file. ---------
    c_pad = _round_up(C, 8)
    base_chunk = max(128, min(chunk_n_cap, ((8192 // c_pad) // 128) * 128))
    if HW >= 128:
        chunk_n = min(base_chunk, (HW // 128) * 128)
    else:
        chunk_n = HW                                   # tiny input: one chunk
    fold_w = min(128, chunk_n)

    # --- tile_n: pixels per grid step (DMA granularity).  Target >= ~2 MiB of
    # logits per step to amortize the ~0.35us fixed per-step cost; cap so the
    # double-buffered input tiles stay <= ~24 MiB (well under v7x's 64 MiB). --
    col_bytes = C * itemsize + 4                       # logits + int32 label
    tile_by_vmem = (24 * 1024 * 1024) // (2 * col_bytes)
    tile_target = max(8192, (2 * 1024 * 1024) // max(C * itemsize, 1))
    tile_n = max(chunk_n, min(tile_target, tile_by_vmem, tile_n_cap))
    tile_n = (tile_n // chunk_n) * chunk_n
    if HW >= chunk_n:
        tile_n = min(tile_n, (HW // chunk_n) * chunk_n)  # last block start < HW
    else:
        tile_n = chunk_n

    nt = pl.cdiv(HW, tile_n)
    needs_mask = (HW % tile_n) != 0

    # Split the pixel axis across a second "parallel" grid slot when the batch
    # axis alone cannot occupy both v7x TensorCores (no-op on v5e/v6e).
    n_split = 2 if (B % 2 == 1 and nt % 2 == 0) else 1
    nt_inner = nt // n_split

    n_chunks = tile_n // chunk_n
    unroll = n_chunks if n_chunks <= 8 else 8

    kernel = functools.partial(
        _dice_partial_kernel,
        use_softmax=softmax, hw=HW, tile_n=tile_n, chunk_n=chunk_n,
        nt_total=nt, nt_inner=nt_inner, needs_mask=needs_mask, unroll=unroll)

    part_shape = jax.ShapeDtypeStruct((B * n_split, C, fold_w), jnp.float32)
    part_spec = pl.BlockSpec((pl.Squeezed(), C, fold_w),
                             lambda b, s, n: (b * n_split + s, 0, 0))
    x_spec = pl.BlockSpec((pl.Squeezed(), C, tile_n),
                          lambda b, s, n: (b, 0, s * nt_inner + n))
    t_spec = pl.BlockSpec((pl.Squeezed(), 1, tile_n),
                          lambda b, s, n: (b, 0, s * nt_inner + n))

    i_p, z_p, y_p = pl.pallas_call(
        kernel,
        out_shape=(part_shape, part_shape, part_shape),
        grid_spec=pltpu.PrefetchScalarGridSpec(
            num_scalar_prefetch=0,
            grid=(B, n_split, nt_inner),
            in_specs=[x_spec, t_spec],
            out_specs=(part_spec, part_spec, part_spec),
        ),
        compiler_params=pltpu.CompilerParams(
            dimension_semantics=("parallel", "parallel", "arbitrary"),
            vmem_limit_bytes=48 * 1024 * 1024,
        ),
    )(x, t)

    # Tiny O(C) epilogue: collapse lanes/batch/split, form dice, weight, mean.
    intersect = jnp.sum(i_p, axis=(0, 2))              # (C,)
    z_sum = jnp.sum(z_p, axis=(0, 2))                  # (C,)
    y_sum = jnp.sum(y_p, axis=(0, 2))                  # (C,)

    if weight is None:
        w = jnp.ones((C,), jnp.float32)
    else:
        w = jnp.asarray(weight, jnp.float32).reshape(C)

    smooth = 1e-05
    dice = 1.0 - (2.0 * intersect + smooth) / (z_sum + y_sum + smooth)
    return jnp.sum(dice * w) / C


def _dice_loss_ref(logits, target, weight=None, *, softmax=True):
    """Plain-JAX reference mirroring the PyTorch module."""
    B, C, H, W = logits.shape
    x = logits.astype(jnp.float32)
    if softmax:
        x = jax.nn.softmax(x, axis=1)
    onehot = jax.nn.one_hot(target, C, axis=1, dtype=jnp.float32)  # (B,C,H,W)
    if weight is None:
        weight = [1.0] * C
    smooth = 1e-05
    loss = 0.0
    for i in range(C):
        s = x[:, i]
        tg = onehot[:, i]
        intersect = jnp.sum(s * tg)
        y_sum = jnp.sum(tg * tg)
        z_sum = jnp.sum(s * s)
        dice = 1.0 - (2 * intersect + smooth) / (z_sum + y_sum + smooth)
        loss = loss + dice * weight[i]
    return loss / C


if __name__ == "__main__":
    key = jax.random.PRNGKey(0)
    k1, k2, k3, k4, k5, k6 = jax.random.split(key, 6)

    # Case 1: single unmasked tile, single chunk (B=2, C=4, 16x16).
    B, C, H, W = 2, 4, 16, 16
    logits = jax.random.normal(k1, (B, C, H, W), dtype=jnp.float32)
    target = jax.random.randint(k2, (B, H, W), 0, C, dtype=jnp.int32)
    loss = dice_loss(logits, target, softmax=True)
    jax.block_until_ready(loss)
    loss_ref = _dice_loss_ref(logits, target, softmax=True)
    assert jnp.allclose(loss, loss_ref, atol=5e-3, rtol=5e-3), (loss, loss_ref)

    # Case 2: strip-mined multi-chunk tiles + masked tail tile (72x72), weights.
    B2, C2, H2, W2 = 2, 4, 72, 72
    logits2 = jax.random.normal(k3, (B2, C2, H2, W2), dtype=jnp.float32)
    target2 = jax.random.randint(k4, (B2, H2, W2), 0, C2, dtype=jnp.int32)
    wts = [0.5, 1.0, 2.0, 1.5]
    loss2 = dice_loss(logits2, target2, weight=wts, softmax=True)
    jax.block_until_ready(loss2)
    loss2_ref = _dice_loss_ref(logits2, target2, weight=wts, softmax=True)
    assert jnp.allclose(loss2, loss2_ref, atol=5e-3, rtol=5e-3), (loss2, loss2_ref)

    # Case 3: B=1 engages the 2-way pixel-axis split (v7x both-TC path), bf16
    # logits cast in-kernel, multi-tile grid with masked tail tile.
    B3, C3, H3, W3 = 1, 4, 40, 50
    logits3 = jax.random.normal(k5, (B3, C3, H3, W3),
                                dtype=jnp.float32).astype(jnp.bfloat16)
    target3 = jax.random.randint(k6, (B3, H3, W3), 0, C3, dtype=jnp.int32)
    loss3 = dice_loss(logits3, target3, softmax=True,
                      tile_n_cap=1024, chunk_n_cap=512)
    jax.block_until_ready(loss3)
    loss3_ref = _dice_loss_ref(logits3.astype(jnp.float32), target3, softmax=True)
    assert jnp.allclose(loss3, loss3_ref, atol=1e-2, rtol=1e-2), (loss3, loss3_ref)

    print("KERNEL_OK")
</pallas_src>

<mosaic_0001>
module attributes {stable_mosaic.version = 11 : i64} {
  func.func @_dice_partial_kernel(%arg0: i32, %arg1: i32, %arg2: i32, %arg3: memref<1x4x256xf32, #tpu.memory_space<vmem>>, %arg4: memref<1x1x256xi32, #tpu.memory_space<vmem>>, %arg5: memref<1x4x128xf32, #tpu.memory_space<vmem>>, %arg6: memref<1x4x128xf32, #tpu.memory_space<vmem>>, %arg7: memref<1x4x128xf32, #tpu.memory_space<vmem>>) attributes {dimension_semantics = [#tpu.dimension_semantics<parallel>, #tpu.dimension_semantics<parallel>, #tpu.dimension_semantics<arbitrary>], iteration_bounds = array<i64: 2, 1, 1>, scalar_prefetch = 0 : i64, scratch_operands = 0 : i64, tpu.core_type = #tpu.core_type<tc>, window_params = [{transform_indices = @transform_0, window_bounds = array<i64: 1, 4, 256>}, {transform_indices = @transform_1, window_bounds = array<i64: 1, 1, 256>}, {transform_indices = @transform_2, window_bounds = array<i64: 1, 4, 128>}, {transform_indices = @transform_3, window_bounds = array<i64: 1, 4, 128>}, {transform_indices = @transform_4, window_bounds = array<i64: 1, 4, 128>}]} {
    %c0_i32 = arith.constant 0 : i32
    %0 = arith.cmpi eq, %arg2, %c0_i32 : i32
    %1 = arith.extui %0 : i1 to i32
    %c0_i32_0 = arith.constant 0 : i32
    %2 = arith.cmpi ne, %1, %c0_i32_0 : i32
    scf.if %2 {
      %cst_27 = arith.constant 0.000000e+00 : f32
      %57 = vector.broadcast %cst_27 : f32 to vector<4x128xf32>
      %c0_28 = arith.constant 0 : index
      %c0_29 = arith.constant 0 : index
      %c0_30 = arith.constant 0 : index
      %58 = vector.load %arg5[%c0_28, %c0_29, %c0_30] : memref<1x4x128xf32, #tpu.memory_space<vmem>>, vector<1x4x128xf32>
      %59 = vector.shape_cast %58 : vector<1x4x128xf32> to vector<4x128xf32>
      %60 = vector.shape_cast %57 : vector<4x128xf32> to vector<1x4x128xf32>
      tpu.vector_store %arg5[%c0_28, %c0_29, %c0_30], %60 {strides = array<i32>} : memref<1x4x128xf32, #tpu.memory_space<vmem>>, vector<1x4x128xf32>,
      %cst_31 = arith.constant 0.000000e+00 : f32
      %61 = vector.broadcast %cst_31 : f32 to vector<4x128xf32>
      %c0_32 = arith.constant 0 : index
      %c0_33 = arith.constant 0 : index
      %c0_34 = arith.constant 0 : index
      %62 = vector.load %arg6[%c0_32, %c0_33, %c0_34] : memref<1x4x128xf32, #tpu.memory_space<vmem>>, vector<1x4x128xf32>
      %63 = vector.shape_cast %62 : vector<1x4x128xf32> to vector<4x128xf32>
      %64 = vector.shape_cast %61 : vector<4x128xf32> to vector<1x4x128xf32>
      tpu.vector_store %arg6[%c0_32, %c0_33, %c0_34], %64 {strides = array<i32>} : memref<1x4x128xf32, #tpu.memory_space<vmem>>, vector<1x4x128xf32>,
      %cst_35 = arith.constant 0.000000e+00 : f32
      %65 = vector.broadcast %cst_35 : f32 to vector<4x128xf32>
      %c0_36 = arith.constant 0 : index
      %c0_37 = arith.constant 0 : index
      %c0_38 = arith.constant 0 : index
      %66 = vector.load %arg7[%c0_36, %c0_37, %c0_38] : memref<1x4x128xf32, #tpu.memory_space<vmem>>, vector<1x4x128xf32>
      %67 = vector.shape_cast %66 : vector<1x4x128xf32> to vector<4x128xf32>
      %68 = vector.shape_cast %65 : vector<4x128xf32> to vector<1x4x128xf32>
      tpu.vector_store %arg7[%c0_36, %c0_37, %c0_38], %68 {strides = array<i32>} : memref<1x4x128xf32, #tpu.memory_space<vmem>>, vector<1x4x128xf32>,
    } else {
    }
    %3 = tpu.iota {dimensions = array<i32: 0>} : vector<4x256xi32>
    %c0_i32_1 = arith.constant 0 : i32
    %c256_i32 = arith.constant 256 : i32
    %4 = arith.muli %c0_i32_1, %c256_i32 : i32
    %5 = tpu.assume_multiple %4, 128 : i32
    %c0 = arith.constant 0 : index
    %c0_2 = arith.constant 0 : index
    %6 = arith.index_cast %5 : i32 to index
    %7 = vector.load %arg3[%c0, %c0_2, %6] : memref<1x4x256xf32, #tpu.memory_space<vmem>>, vector<1x4x256xf32>
    %8 = vector.shape_cast %7 : vector<1x4x256xf32> to vector<4x256xf32>
    %c0_3 = arith.constant 0 : index
    %c0_4 = arith.constant 0 : index
    %9 = arith.index_cast %5 : i32 to index
    %10 = vector.load %arg4[%c0_3, %c0_4, %9] : memref<1x1x256xi32, #tpu.memory_space<vmem>>, vector<1x1x256xi32>
    %11 = vector.shape_cast %10 : vector<1x1x256xi32> to vector<1x256xi32>
    %cst = arith.constant dense<0xFF800000> : vector<256xf32>
    %12 = vector.multi_reduction <maximumf>, %8, %cst [0] : vector<4x256xf32> to vector<256xf32>
    %13 = vector.shape_cast %12 : vector<256xf32> to vector<1x256xf32>
    %14 = vector.broadcast %13 : vector<1x256xf32> to vector<4x256xf32>
    %15 = arith.subf %8, %14 : vector<4x256xf32>
    %16 = math.exp %15 : vector<4x256xf32>
    %cst_5 = arith.constant dense<0.000000e+00> : vector<256xf32>
    %17 = vector.multi_reduction <add>, %16, %cst_5 [0] : vector<4x256xf32> to vector<256xf32>
    %18 = vector.shape_cast %17 : vector<256xf32> to vector<1x256xf32>
    %19 = tpu.reciprocal %18 {approx = true} : vector<1x256xf32> -> vector<1x256xf32>
    %20 = vector.broadcast %19 : vector<1x256xf32> to vector<4x256xf32>
    %21 = arith.mulf %16, %20 : vector<4x256xf32>
    %22 = vector.broadcast %11 : vector<1x256xi32> to vector<4x256xi32>
    %23 = arith.cmpi eq, %3, %22 : vector<4x256xi32>
    %cst_6 = arith.constant 0.000000e+00 : f32
    %24 = vector.broadcast %cst_6 : f32 to vector<4x256xf32>
    %25 = arith.select %23, %21, %24 : vector<4x256xi1>, vector<4x256xf32>
    %cst_7 = arith.constant 1.000000e+00 : f32
    %cst_8 = arith.constant 0.000000e+00 : f32
    %26 = vector.broadcast %cst_7 : f32 to vector<4x256xf32>
    %27 = vector.broadcast %cst_8 : f32 to vector<4x256xf32>
    %28 = arith.select %23, %26, %27 : vector<4x256xi1>, vector<4x256xf32>
    %c0_9 = arith.constant 0 : index
    %c0_10 = arith.constant 0 : index
    %c0_11 = arith.constant 0 : index
    %29 = vector.load %arg5[%c0_9, %c0_10, %c0_11] : memref<1x4x128xf32, #tpu.memory_space<vmem>>, vector<1x4x128xf32>
    %30 = vector.shape_cast %29 : vector<1x4x128xf32> to vector<4x128xf32>
    %31 = vector.extract_strided_slice %25 {offsets = [0, 0], sizes = [4, 128], strides = [1, 1]} : vector<4x256xf32> to vector<4x128xf32>
    %32 = vector.extract_strided_slice %25 {offsets = [0, 128], sizes = [4, 128], strides = [1, 1]} : vector<4x256xf32> to vector<4x128xf32>
    %33 = arith.addf %31, %32 : vector<4x128xf32>
    %34 = arith.addf %30, %33 : vector<4x128xf32>
    %c0_12 = arith.constant 0 : index
    %c0_13 = arith.constant 0 : index
    %c0_14 = arith.constant 0 : index
    %35 = vector.load %arg5[%c0_12, %c0_13, %c0_14] : memref<1x4x128xf32, #tpu.memory_space<vmem>>, vector<1x4x128xf32>
    %36 = vector.shape_cast %35 : vector<1x4x128xf32> to vector<4x128xf32>
    %37 = vector.shape_cast %34 : vector<4x128xf32> to vector<1x4x128xf32>
    tpu.vector_store %arg5[%c0_12, %c0_13, %c0_14], %37 {strides = array<i32>} : memref<1x4x128xf32, #tpu.memory_space<vmem>>, vector<1x4x128xf32>,
    %c0_15 = arith.constant 0 : index
    %c0_16 = arith.constant 0 : index
    %c0_17 = arith.constant 0 : index
    %38 = vector.load %arg6[%c0_15, %c0_16, %c0_17] : memref<1x4x128xf32, #tpu.memory_space<vmem>>, vector<1x4x128xf32>
    %39 = vector.shape_cast %38 : vector<1x4x128xf32> to vector<4x128xf32>
    %40 = arith.mulf %21, %21 : vector<4x256xf32>
    %41 = vector.extract_strided_slice %40 {offsets = [0, 0], sizes = [4, 128], strides = [1, 1]} : vector<4x256xf32> to vector<4x128xf32>
    %42 = vector.extract_strided_slice %40 {offsets = [0, 128], sizes = [4, 128], strides = [1, 1]} : vector<4x256xf32> to vector<4x128xf32>
    %43 = arith.addf %41, %42 : vector<4x128xf32>
    %44 = arith.addf %39, %43 : vector<4x128xf32>
    %c0_18 = arith.constant 0 : index
    %c0_19 = arith.constant 0 : index
    %c0_20 = arith.constant 0 : index
    %45 = vector.load %arg6[%c0_18, %c0_19, %c0_20] : memref<1x4x128xf32, #tpu.memory_space<vmem>>, vector<1x4x128xf32>
    %46 = vector.shape_cast %45 : vector<1x4x128xf32> to vector<4x128xf32>
    %47 = vector.shape_cast %44 : vector<4x128xf32> to vector<1x4x128xf32>
    tpu.vector_store %arg6[%c0_18, %c0_19, %c0_20], %47 {strides = array<i32>} : memref<1x4x128xf32, #tpu.memory_space<vmem>>, vector<1x4x128xf32>,
    %c0_21 = arith.constant 0 : index
    %c0_22 = arith.constant 0 : index
    %c0_23 = arith.constant 0 : index
    %48 = vector.load %arg7[%c0_21, %c0_22, %c0_23] : memref<1x4x128xf32, #tpu.memory_space<vmem>>, vector<1x4x128xf32>
    %49 = vector.shape_cast %48 : vector<1x4x128xf32> to vector<4x128xf32>
    %50 = vector.extract_strided_slice %28 {offsets = [0, 0], sizes = [4, 128], strides = [1, 1]} : vector<4x256xf32> to vector<4x128xf32>
    %51 = vector.extract_strided_slice %28 {offsets = [0, 128], sizes = [4, 128], strides = [1, 1]} : vector<4x256xf32> to vector<4x128xf32>
    %52 = arith.addf %50, %51 : vector<4x128xf32>
    %53 = arith.addf %49, %52 : vector<4x128xf32>
    %c0_24 = arith.constant 0 : index
    %c0_25 = arith.constant 0 : index
    %c0_26 = arith.constant 0 : index
    %54 = vector.load %arg7[%c0_24, %c0_25, %c0_26] : memref<1x4x128xf32, #tpu.memory_space<vmem>>, vector<1x4x128xf32>
    %55 = vector.shape_cast %54 : vector<1x4x128xf32> to vector<4x128xf32>
    %56 = vector.shape_cast %53 : vector<4x128xf32> to vector<1x4x128xf32>
    tpu.vector_store %arg7[%c0_24, %c0_25, %c0_26], %56 {strides = array<i32>} : memref<1x4x128xf32, #tpu.memory_space<vmem>>, vector<1x4x128xf32>,
    %c1_i32 = arith.constant 1 : i32
    return
  }
  func.func @transform_0(%arg0: i32, %arg1: i32, %arg2: i32) -> (i32, i32, i32) {
    %c1_i32 = arith.constant 1 : i32
    %0 = arith.muli %arg1, %c1_i32 : i32
    %1 = arith.addi %0, %arg2 : i32
    %c0_i32 = arith.constant 0 : i32
    %c0_i32_0 = arith.constant 0 : i32
    return %arg0, %c0_i32, %1 : i32, i32, i32
  }
  func.func @transform_1(%arg0: i32, %arg1: i32, %arg2: i32) -> (i32, i32, i32) {
    %c1_i32 = arith.constant 1 : i32
    %0 = arith.muli %arg1, %c1_i32 : i32
    %1 = arith.addi %0, %arg2 : i32
    %c0_i32 = arith.constant 0 : i32
    %c0_i32_0 = arith.constant 0 : i32
    return %arg0, %c0_i32, %1 : i32, i32, i32
  }
  func.func @transform_2(%arg0: i32, %arg1: i32, %arg2: i32) -> (i32, i32, i32) {
    %c1_i32 = arith.constant 1 : i32
    %0 = arith.muli %arg0, %c1_i32 : i32
    %1 = arith.addi %0, %arg1 : i32
    %c0_i32 = arith.constant 0 : i32
    %c0_i32_0 = arith.constant 0 : i32
    %c0_i32_1 = arith.constant 0 : i32
    return %1, %c0_i32, %c0_i32_0 : i32, i32, i32
  }
  func.func @transform_3(%arg0: i32, %arg1: i32, %arg2: i32) -> (i32, i32, i32) {
    %c1_i32 = arith.constant 1 : i32
    %0 = arith.muli %arg0, %c1_i32 : i32
    %1 = arith.addi %0, %arg1 : i32
    %c0_i32 = arith.constant 0 : i32
    %c0_i32_0 = arith.constant 0 : i32
    %c0_i32_1 = arith.constant 0 : i32
    return %1, %c0_i32, %c0_i32_0 : i32, i32, i32
  }
  func.func @transform_4(%arg0: i32, %arg1: i32, %arg2: i32) -> (i32, i32, i32) {
    %c1_i32 = arith.constant 1 : i32
    %0 = arith.muli %arg0, %c1_i32 : i32
    %1 = arith.addi %0, %arg1 : i32
    %c0_i32 = arith.constant 0 : i32
    %c0_i32_0 = arith.constant 0 : i32
    %c0_i32_1 = arith.constant 0 : i32
    return %1, %c0_i32, %c0_i32_0 : i32, i32, i32
  }
}

</mosaic_0001>

<llo_original>
// kernel: tpu_custom_call.1
$region0: #{tpu_custom_call.1}
  #allocation0 [shape = 'u32[]', space=smem, size = 0x4, offset = 0x4, fixed_abs, tag = 'smem constant byte address 0x4 - core index']
  #allocation1 [shape = 'u32[72,128]{1,0:T(1,128)}', space=vmem, size = 0x9000, scoped, tag = 'internal scratch']
  %s0 = inlined_call_operand.hbm [shape: f32[2,4,256], index: 0, kind: input, shape index: {}]
  %s1 = inlined_call_operand.hbm [shape: s32[2,1,256], index: 1, kind: input, shape index: {}]
  %s2 = inlined_call_operand.hbm [shape: f32[2,4,128], index: 2, kind: output, shape index: {0}]
  %s3 = inlined_call_operand.hbm [shape: f32[2,4,128], index: 3, kind: output, shape index: {1}]
  %s4 = inlined_call_operand.hbm [shape: f32[2,4,128], index: 4, kind: output, shape index: {2}]
  %5 = xla_tuple %s2, %s3, %s4
  %s6 = sld [smem:[#allocation0]]
  $region69: #{tpu_custom_call.1} parent=0
    _
  %s8 = ssub.s32 1, %s6
  %s9 = scalar_select 0, %s8, %s6
  $region1: #{tpu_custom_call.1} parent=0
    #allocation2 [shape = 'u8[8192]{0}', space=vmem, size = 0x2000, scoped, tag = 'input window, operand 0']
    #allocation3 [shape = 's32[2]{0}', space=sflag, size = 0x8, scoped, tag = 'scoped memory for tpu_custom_call.1']
    #allocation4 [shape = 's32[2]{0}', space=sflag, size = 0x8, scoped, tag = 'scoped memory for tpu_custom_call.1']
    #allocation5 [shape = 'u8[2048]{0}', space=vmem, size = 0x800, scoped, tag = 'input window, operand 1']
    #allocation6 [shape = 's32[2]{0}', space=sflag, size = 0x8, scoped, tag = 'scoped memory for tpu_custom_call.1']
    #allocation7 [shape = 'u8[4096]{0}', space=vmem, size = 0x1000, scoped, tag = 'output window, operand 0']
    #allocation8 [shape = 'u8[4096]{0}', space=vmem, size = 0x1000, scoped, tag = 'output window, operand 1']
    #allocation9 [shape = 's32[2]{0}', space=sflag, size = 0x8, scoped, tag = 'scoped memory for tpu_custom_call.1']
    #allocation10 [shape = 'u8[4096]{0}', space=vmem, size = 0x1000, scoped, tag = 'output window, operand 2']
    %10 = vsyncpa [#allocation3], 0
    %s11 = scalar_lea.sflag [#allocation3], 1
    %12 = vsyncpa %s11, 0
    %13 = vsyncpa [#allocation6], 0
    %s14 = scalar_lea.sflag [#allocation6], 1
    %15 = vsyncpa %s14, 0
    %16 = vsyncpa [#allocation4], 0
    %s17 = scalar_lea.sflag [#allocation4], 1
    %18 = vsyncpa %s17, 0
    %19 = vsyncpa [#allocation9], 0
    %s20 = scalar_lea.sflag [#allocation9], 1
    %21 = vsyncpa %s20, 0
    loop: start=0, step=1, limit=4
    $region2: #{tpu_custom_call.1} parent=1 // loop_pre_header
      _
    $region3: #{tpu_custom_call.1} parent=1 // loop_header
      %s23 = sphi 0, %s27
      %p24 = scmp.ge.s32.totalorder %s23, 4
      %s30 = sphi 0, %s49
      %s31 = sphi 0, %s45
      %s32 = sphi 0, %s41
      %s33 = sphi 0, %s30
      %s34 = sphi 0, %s31
      %s35 = sphi 0, %s32
      %s36 = sphi 0, %s33
      %s37 = sphi 0, %s34
      %s38 = sphi 0, %s35
      %s56 = sphi 0, %s58
      %s59 = sphi 0, %s56
      %s60 = sphi 0, %s59
      %s76 = sphi 0, %s60
      %s86 = sphi 0, %s88
      %s89 = sphi 0, %s86
      %s90 = sphi 0, %s89
      %s106 = sphi 0, %s90
      %s114 = sphi 0, %s116
      %s117 = sphi 0, %s114
      %s118 = sphi 0, %s117
      %s134 = sphi 0, %s118
      %s142 = sphi 0, %s144
      %s145 = sphi 0, %s142
      %s146 = sphi 0, %s145
      %s162 = sphi 0, %s146
      %s170 = sphi 0, %s172
      %s173 = sphi 0, %s170
      %s174 = sphi 0, %s173
      %s190 = sphi 0, %s174
    $region4: #{tpu_custom_call.1} parent=1 // loop_header_branch
      %26 = sbr.rel (%p24) target = $region8
    $region5: #{tpu_custom_call.1} parent=1 // loop_body
      %s28 = ssub.s32 %s23, 1
      %s29 = ssub.s32 %s23, 2
      %s39 = sadd.s32 1, %s32
      %p40 = scmp.ge.s32.totalorder %s39, 1
      %s41 = scalar_select %p40, 0, %s39
      %s42 = sadd.s32 1, %s31
      %s43 = scalar_select %p40, %s42, %s31
      %p44 = scmp.ge.s32.totalorder %s43, 1
      %s45 = scalar_select %p44, 0, %s43
      %s46 = sadd.s32 1, %s30
      %s47 = scalar_select %p44, %s46, %s30
      %p48 = scmp.ge.s32.totalorder %s47, 2
      %s49 = scalar_select %p48, 0, %s47
      %s50 = sadd.s32 %s31, %s32
      %s51 = sadd.s32 %s45, %s41
      %s52 = ssub.s32 %s30, %s49
      %s53 = ssub.s32 %s50, %s51
      %s54 = sor.u32 %s52, %s53
      %p55 = scmp.eq.s32.totalorder %s54, 0
      %s57 = sadd.s32 %s56, 1
      %s58 = scalar_select %p55, %s56, %s57
      %p61 = pneg %p55
      %p62 = scmp.eq.s32.totalorder %s23, 1
      %p63 = por %p61, %p62
      %p64 = scmp.ne.s32.totalorder %s56, %s59
      %p65 = scmp.eq.s32.totalorder %s23, 0
      %p66 = por %p64, %p65
      %p67 = scmp.ne.s32.totalorder %s56, %s59
      %p68 = scmp.eq.s32.totalorder %s28, 1
      %p69 = por %p67, %p68
      %p70 = scmp.ne.s32.totalorder %s59, %s60
      %p71 = scmp.eq.s32.totalorder %s28, 0
      %p72 = por %p70, %p71
      %p73 = scmp.ne.s32.totalorder %s59, %s60
      %p74 = scmp.eq.s32.totalorder %s29, 1
      %p75 = por %p73, %p74
      %p77 = scmp.ne.s32.totalorder %s60, %s76
      %p78 = scmp.eq.s32.totalorder %s29, 0
      %p79 = por %p77, %p78
      %s80 = sadd.s32 %s31, %s32
      %s81 = sadd.s32 %s45, %s41
      %s82 = ssub.s32 %s30, %s49
      %s83 = ssub.s32 %s80, %s81
      %s84 = sor.u32 %s82, %s83
      %p85 = scmp.eq.s32.totalorder %s84, 0
      %s87 = sadd.s32 %s86, 1
      %s88 = scalar_select %p85, %s86, %s87
      %p91 = pneg %p85
      %p92 = scmp.eq.s32.totalorder %s23, 1
      %p93 = por %p91, %p92
      %p94 = scmp.ne.s32.totalorder %s86, %s89
      %p95 = scmp.eq.s32.totalorder %s23, 0
      %p96 = por %p94, %p95
      %p97 = scmp.ne.s32.totalorder %s86, %s89
      %p98 = scmp.eq.s32.totalorder %s28, 1
      %p99 = por %p97, %p98
      %p100 = scmp.ne.s32.totalorder %s89, %s90
      %p101 = scmp.eq.s32.totalorder %s28, 0
      %p102 = por %p100, %p101
      %p103 = scmp.ne.s32.totalorder %s89, %s90
      %p104 = scmp.eq.s32.totalorder %s29, 1
      %p105 = por %p103, %p104
      %p107 = scmp.ne.s32.totalorder %s90, %s106
      %p108 = scmp.eq.s32.totalorder %s29, 0
      %p109 = por %p107, %p108
      %s110 = sadd.s32 %s30, %s31
      %s111 = sadd.s32 %s49, %s45
      %s112 = ssub.s32 %s110, %s111
      %p113 = scmp.eq.s32.totalorder %s112, 0
      %s115 = sadd.s32 %s114, 1
      %s116 = scalar_select %p113, %s114, %s115
      %p119 = pneg %p113
      %p120 = scmp.eq.s32.totalorder %s23, 1
      %p121 = por %p119, %p120
      %p122 = scmp.ne.s32.totalorder %s114, %s117
      %p123 = scmp.eq.s32.totalorder %s23, 0
      %p124 = por %p122, %p123
      %p125 = scmp.ne.s32.totalorder %s114, %s117
      %p126 = scmp.eq.s32.totalorder %s28, 1
      %p127 = por %p125, %p126
      %p128 = scmp.ne.s32.totalorder %s117, %s118
      %p129 = scmp.eq.s32.totalorder %s28, 0
      %p130 = por %p128, %p129
      %p131 = scmp.ne.s32.totalorder %s117, %s118
      %p132 = scmp.eq.s32.totalorder %s29, 1
      %p133 = por %p131, %p132
      %p135 = scmp.ne.s32.totalorder %s118, %s134
      %p136 = scmp.eq.s32.totalorder %s29, 0
      %p137 = por %p135, %p136
      %s138 = sadd.s32 %s30, %s31
      %s139 = sadd.s32 %s49, %s45
      %s140 = ssub.s32 %s138, %s139
      %p141 = scmp.eq.s32.totalorder %s140, 0
      %s143 = sadd.s32 %s142, 1
      %s144 = scalar_select %p141, %s142, %s143
      %p147 = pneg %p141
      %p148 = scmp.eq.s32.totalorder %s23, 1
      %p149 = por %p147, %p148
      %p150 = scmp.ne.s32.totalorder %s142, %s145
      %p151 = scmp.eq.s32.totalorder %s23, 0
      %p152 = por %p150, %p151
      %p153 = scmp.ne.s32.totalorder %s142, %s145
      %p154 = scmp.eq.s32.totalorder %s28, 1
      %p155 = por %p153, %p154
      %p156 = scmp.ne.s32.totalorder %s145, %s146
      %p157 = scmp.eq.s32.totalorder %s28, 0
      %p158 = por %p156, %p157
      %p159 = scmp.ne.s32.totalorder %s145, %s146
      %p160 = scmp.eq.s32.totalorder %s29, 1
      %p161 = por %p159, %p160
      %p163 = scmp.ne.s32.totalorder %s146, %s162
      %p164 = scmp.eq.s32.totalorder %s29, 0
      %p165 = por %p163, %p164
      %s166 = sadd.s32 %s30, %s31
      %s167 = sadd.s32 %s49, %s45
      %s168 = ssub.s32 %s166, %s167
      %p169 = scmp.eq.s32.totalorder %s168, 0
      %s171 = sadd.s32 %s170, 1
      %s172 = scalar_select %p169, %s170, %s171
      %p175 = pneg %p169
      %p176 = scmp.eq.s32.totalorder %s23, 1
      %p177 = por %p175, %p176
      %p178 = scmp.ne.s32.totalorder %s170, %s173
      %p179 = scmp.eq.s32.totalorder %s23, 0
      %p180 = por %p178, %p179
      %p181 = scmp.ne.s32.totalorder %s170, %s173
      %p182 = scmp.eq.s32.totalorder %s28, 1
      %p183 = por %p181, %p182
      %p184 = scmp.ne.s32.totalorder %s173, %s174
      %p185 = scmp.eq.s32.totalorder %s28, 0
      %p186 = por %p184, %p185
      %p187 = scmp.ne.s32.totalorder %s173, %s174
      %p188 = scmp.eq.s32.totalorder %s29, 1
      %p189 = por %p187, %p188
      %p191 = scmp.ne.s32.totalorder %s174, %s190
      %p192 = scmp.eq.s32.totalorder %s29, 0
      %p193 = por %p191, %p192
      %p194 = scmp.le.s32.totalorder 1, %s23
      %p195 = scmp.lt.s32.totalorder %s23, 3
      %p196 = pnand %p194, %p195
      %p197 = pneg %p196
      // Predicated region
      $region9: #{tpu_custom_call.1} parent=5 // pred_check
        _
      $region10: #{tpu_custom_call.1} parent=5 // pred_check_branch
        %199 = sbr.rel (%p196) target = $region12
      $region11: #{tpu_custom_call.1} parent=5 // pred_region
        %s200 = ssub.s32 %s23, 1
      $region12: #{tpu_custom_call.1} parent=5 // pred_fallthru
        _
      %p201 = scmp.lt.s32.totalorder %s23, 2
      // Predicated region
      $region13: #{tpu_custom_call.1} parent=5 // pred_check
        %p202 = pneg %p201
      $region14: #{tpu_custom_call.1} parent=5 // pred_check_branch
        %204 = sbr.rel (%p202) target = $region16
      $region15: #{tpu_custom_call.1} parent=5 // pred_region
        // Predicated region
        $region17: #{tpu_custom_call.1} parent=15 // pred_check
          %p205 = pneg %p66
        $region18: #{tpu_custom_call.1} parent=15 // pred_check_branch
          %207 = sbr.rel (%p205) target = $region20
        $region19: #{tpu_custom_call.1} parent=15 // pred_region
          %s208 = sand.u32 %s56, 1
          %s209 = scalar_lea.sflag [#allocation3], %s208
          %s210 = sand.u32 %s56, 1
          %s211 = smul.addr %s210, 8
          %s212 = scalar_lea.vmem [#allocation2], %s211
          %s213 = sadd.s32 %s31, %s32
          %s214 = smul.u32 2, %s213
          %216 = vsyncadd %s209, 0
          %s217 = smul.addr %s30, 2
          %s218 = sadd.s32 %s214, %s217
          %s219 = smul.addr %s218, 4
          %s220 = scalar_lea.hbm %s0, %s219
          %s222 = sshll.u32 %s220, 4
          %s223 = int_to_ptr.hbm [resolvable:$true] %s222
          %s224 = sshll.u32 %s212, 4
          %s225 = int_to_ptr.vmem [resolvable:$true] %s224
          %227 = dma.hbm_to_vmem [thread:$0]  %s223, 128, %s225, %s209
        $region20: #{tpu_custom_call.1} parent=15 // pred_fallthru
          _
        // Predicated region
        $region21: #{tpu_custom_call.1} parent=15 // pred_check
          %p228 = pneg %p96
        $region22: #{tpu_custom_call.1} parent=15 // pred_check_branch
          %230 = sbr.rel (%p228) target = $region24
        $region23: #{tpu_custom_call.1} parent=15 // pred_region
          %s231 = sand.u32 %s86, 1
          %s232 = scalar_lea.sflag [#allocation6], %s231
          %s233 = sand.u32 %s86, 1
          %s234 = smul.addr %s233, 2
          %s235 = scalar_lea.vmem [#allocation5], %s234
          %s236 = sadd.s32 %s31, %s32
          %s237 = smul.u32 2, %s236
          %239 = vsyncadd %s232, 0
          %s240 = smul.addr %s30, 2
          %s241 = sadd.s32 %s237, %s240
          %s242 = scalar_lea.hbm %s1, %s241
          %s244 = sshll.u32 %s242, 4
          %s245 = int_to_ptr.hbm [resolvable:$true] %s244
          %s246 = sshll.u32 %s235, 4
          %s247 = int_to_ptr.vmem [resolvable:$true] %s246
          %249 = dma.hbm_to_vmem [thread:$0]  %s245, 32, %s247, %s232
        $region24: #{tpu_custom_call.1} parent=15 // pred_fallthru
          _
      $region16: #{tpu_custom_call.1} parent=5 // pred_fallthru
        _
      %p250 = scmp.le.s32.totalorder 1, %s23
      %p251 = scmp.lt.s32.totalorder %s23, 3
      %p252 = pnand %p250, %p251
      %p253 = pneg %p252
      // Predicated region
      $region25: #{tpu_custom_call.1} parent=5 // pred_check
        _
      $region26: #{tpu_custom_call.1} parent=5 // pred_check_branch
        %255 = sbr.rel (%p252) target = $region28
      $region27: #{tpu_custom_call.1} parent=5 // pred_region
        %s256 = ssub.s32 %s23, 1
        %s257 = sand.u32 %s59, 1
        %s258 = scalar_lea.sflag [#allocation3], %s257
        %s259 = sand.u32 %s59, 1
        %s260 = smul.addr %s259, 8
        %s261 = scalar_lea.vmem [#allocation2], %s260
        // Predicated region
        $region29: #{tpu_custom_call.1} parent=27 // pred_check
          %p262 = pneg %p72
        $region30: #{tpu_custom_call.1} parent=27 // pred_check_branch
          %264 = sbr.rel (%p262) target = $region32
        $region31: #{tpu_custom_call.1} parent=27 // pred_region
          %266 = dma.done %s258, 128
        $region32: #{tpu_custom_call.1} parent=27 // pred_fallthru
          _
        %s267 = sand.u32 %s89, 1
        %s268 = scalar_lea.sflag [#allocation6], %s267
        %s269 = sand.u32 %s89, 1
        %s270 = smul.addr %s269, 2
        %s271 = scalar_lea.vmem [#allocation5], %s270
        // Predicated region
        $region33: #{tpu_custom_call.1} parent=27 // pred_check
          %p272 = pneg %p102
        $region34: #{tpu_custom_call.1} parent=27 // pred_check_branch
          %274 = sbr.rel (%p272) target = $region36
        $region35: #{tpu_custom_call.1} parent=27 // pred_region
          %276 = dma.done %s268, 32
        $region36: #{tpu_custom_call.1} parent=27 // pred_fallthru
          _
        %s277 = sand.u32 %s59, 1
        %s278 = scalar_lea.sflag [#allocation3], %s277
        %s279 = sand.u32 %s59, 1
        %s280 = smul.addr %s279, 8
        %s281 = scalar_lea.vmem [#allocation2], %s280
        %p282 = pneg %p72
        %p283 = pneg %p69
        %s284 = sand.u32 %s89, 1
        %s285 = scalar_lea.sflag [#allocation6], %s284
        %s286 = sand.u32 %s89, 1
        %s287 = smul.addr %s286, 2
        %s288 = scalar_lea.vmem [#allocation5], %s287
        %p289 = pneg %p102
        %p290 = pneg %p99
        %p291 = pneg %p130
        %p292 = pneg %p127
        %s293 = sand.u32 %s117, 1
        %s294 = scalar_lea.sflag [#allocation4], %s293
        %s295 = sand.u32 %s117, 1
        %s296 = smul.addr %s295, 4
        %s297 = scalar_lea.vmem [#allocation7], %s296
        %p298 = pneg %p158
        %p299 = pneg %p155
        %s300 = sand.u32 %s28, 1
        %s301 = scalar_lea.sflag [#allocation9], %s300
        %s302 = sand.u32 %s145, 1
        %s303 = smul.addr %s302, 4
        %s304 = scalar_lea.vmem [#allocation8], %s303
        %p305 = pneg %p186
        %p306 = pneg %p183
        %s307 = sand.u32 %s28, 1
        %s308 = scalar_lea.sflag [#allocation9], %s307
        %s309 = sand.u32 %s173, 1
        %s310 = smul.addr %s309, 4
        %s311 = scalar_lea.vmem [#allocation10], %s310
        %s312 = sadd.s32 %s34, %s35
        %s313 = smul.u32 2, %s312
        %s314 = sadd.s32 %s34, %s35
        %s315 = smul.u32 2, %s314
        %s316 = sadd.s32 %s33, %s34
        %s317 = sadd.s32 %s33, %s34
        %s318 = sadd.s32 %s33, %s34
        %p319 = scmp.eq.s32.totalorder %s35, 0
        // Predicated region
        $region37: #{tpu_custom_call.1} parent=27 // pred_check
          %p320 = pneg %p319
        $region38: #{tpu_custom_call.1} parent=27 // pred_check_branch
          %322 = sbr.rel (%p320) target = $region40
        $region39: #{tpu_custom_call.1} parent=27 // pred_region
          %323 = vst [vmem:[%s297] sm:$0xf] 0.0
          %324 = vst [vmem:[%s304] sm:$0xf] 0.0
          %325 = vst [vmem:[%s311] sm:$0xf] 0.0
        $region40: #{tpu_custom_call.1} parent=27 // pred_fallthru
          _
        %v326 = vlaneseq
        %v327 = vshrl.u32 %v326, 7
        %v328 = vld [vmem:[%s261] sm:$0xff]
        %v329 = vld [vmem:[%s271] sm:$0x3]
        %331 = vst [vmem:[#allocation1] ss:$2 sm:$0xff] %v328
        %v332 = vld.sshfl [vmem:[#allocation1] sm:$0xff pattern:$0x75316420]
        %v333 = vld.sshfl [vmem:[#allocation1 + $0x8] sm:$0xff pattern:$0x75316420]
        %vm336 = vcmask 1043456
        %v337 = vsel %vm336, %v332, -inf
        %v338 = vrot.slane %v337, 4
        %v339 = vmax.f32 %v337, %v338
        %v340 = vrot.slane %v339, 2
        %v341 = vmax.f32 %v339, %v340
        %v342 = vrot.slane %v341, 1
        %v343 = vmax.f32 %v341, %v342
        %v344 = vsel %vm336, %v333, -inf
        %v345 = vrot.slane %v344, 4
        %v346 = vmax.f32 %v344, %v345
        %v347 = vrot.slane %v346, 2
        %v348 = vmax.f32 %v346, %v347
        %v349 = vrot.slane %v348, 1
        %v350 = vmax.f32 %v348, %v349
        %v353 = vrot.slane %v350, 4
        %v354 = vsel %vm336, %v343, %v353
        %v356 = vsub.f32 %v328, %v354
        %v357 = vmul.f32 %v356, 1.442695
        %v358 = vpow.pop %v357
        %360 = vst [vmem:[#allocation1] ss:$2 sm:$0xff] %v358
        %v361 = vld.sshfl [vmem:[#allocation1] sm:$0xff pattern:$0x75316420]
        %v362 = vld.sshfl [vmem:[#allocation1 + $0x8] sm:$0xff pattern:$0x75316420]
        %v365 = vsel %vm336, %v361, 0.0
        %v366 = vrot.slane %v365, 4
        %v367 = vadd.f32 %v365, %v366
        %v368 = vrot.slane %v367, 2
        %v369 = vadd.f32 %v367, %v368
        %v370 = vrot.slane %v369, 1
        %v371 = vadd.f32 %v369, %v370
        %v372 = vsel %vm336, %v362, 0.0
        %v373 = vrot.slane %v372, 4
        %v374 = vadd.f32 %v372, %v373
        %v375 = vrot.slane %v374, 2
        %v376 = vadd.f32 %v374, %v375
        %v377 = vrot.slane %v376, 1
        %v378 = vadd.f32 %v376, %v377
        %v379 = vrcp.pop %v371
        %v380 = vrcp.pop %v378
        %v383 = vrot.slane %v380, 4
        %v384 = vsel %vm336, %v379, %v383
        %v386 = vmul.f32 %v358, %v384
        %v387 = vperm.slane %v329, 0
        %v388 = vperm.slane %v329, 1
        %vm389 = vcmp.eq.s32.totalorder %v327, %v387
        %vm390 = vcmp.eq.s32.totalorder %v327, %v388
        %392 = vst [vmem:[#allocation1] ss:$2 sm:$0xff] %v386
        %v393 = vld.sshfl [vmem:[#allocation1] sm:$0xff pattern:$0x75316420]
        %v394 = vld.sshfl [vmem:[#allocation1 + $0x8] sm:$0xff pattern:$0x75316420]
        %v397 = vsel %vm389, %v393, 0.0
        %v398 = vsel %vm390, %v394, 0.0
        %v399 = vsel %vm389, 1.0, 0.0
        %v400 = vsel %vm390, 1.0, 0.0
        %v401 = vld [vmem:[%s297] sm:$0xf]
        %v402 = vadd.f32 %v397, %v398
        %v403 = vadd.f32 %v401, %v402
        %404 = vst [vmem:[%s297] sm:$0xf] %v403
        %v405 = vld [vmem:[%s304] sm:$0xf]
        %v406 = vmul.f32 %v386, %v386
        %v408 = vrot.slane %v406, 4
        %v410 = vadd.f32 %v406, %v408
        %v411 = vadd.f32 %v405, %v410
        %412 = vst [vmem:[%s304] sm:$0xf] %v411
        %v413 = vld [vmem:[%s311] sm:$0xf]
        %v414 = vadd.f32 %v399, %v400
        %v415 = vadd.f32 %v413, %v414
        %416 = vst [vmem:[%s311] sm:$0xf] %v415
        %s417 = sand.u32 %s117, 1
        %s418 = scalar_lea.sflag [#allocation4], %s417
        %s419 = sand.u32 %s117, 1
        %s420 = smul.addr %s419, 4
        %s421 = scalar_lea.vmem [#allocation7], %s420
        %s422 = sand.u32 %s28, 1
        %s423 = scalar_lea.sflag [#allocation9], %s422
        %s424 = sand.u32 %s145, 1
        %s425 = smul.addr %s424, 4
        %s426 = scalar_lea.vmem [#allocation8], %s425
        %s427 = sand.u32 %s28, 1
        %s428 = scalar_lea.sflag [#allocation9], %s427
        %s429 = sand.u32 %s173, 1
        %s430 = smul.addr %s429, 4
        %s431 = scalar_lea.vmem [#allocation10], %s430
        // Predicated region
        $region41: #{tpu_custom_call.1} parent=27 // pred_check
          %p432 = pneg %p127
        $region42: #{tpu_custom_call.1} parent=27 // pred_check_branch
          %434 = sbr.rel (%p432) target = $region44
        $region43: #{tpu_custom_call.1} parent=27 // pred_region
          %s435 = sadd.s32 %s33, %s34
          %437 = vsyncadd %s418, 0
          %s438 = smul.addr %s435, 4
          %s439 = scalar_lea.hbm %s2, %s438
          %s441 = sshll.u32 %s421, 4
          %s442 = int_to_ptr.vmem [resolvable:$true] %s441
          %s443 = sshll.u32 %s439, 4
          %s444 = int_to_ptr.hbm [resolvable:$true] %s443
          %446 = dma.vmem_to_hbm [thread:$0]  %s442, 64, %s444, %s418
        $region44: #{tpu_custom_call.1} parent=27 // pred_fallthru
          _
        // Predicated region
        $region45: #{tpu_custom_call.1} parent=27 // pred_check
          %p447 = pneg %p155
        $region46: #{tpu_custom_call.1} parent=27 // pred_check_branch
          %449 = sbr.rel (%p447) target = $region48
        $region47: #{tpu_custom_call.1} parent=27 // pred_region
          %s450 = sadd.s32 %s33, %s34
          %452 = vsyncadd %s423, 0
          %s453 = smul.addr %s450, 4
          %s454 = scalar_lea.hbm %s3, %s453
          %s456 = sshll.u32 %s426, 4
          %s457 = int_to_ptr.vmem [resolvable:$true] %s456
          %s458 = sshll.u32 %s454, 4
          %s459 = int_to_ptr.hbm [resolvable:$true] %s458
          %461 = dma.vmem_to_hbm [thread:$0]  %s457, 64, %s459, %s423
        $region48: #{tpu_custom_call.1} parent=27 // pred_fallthru
          _
        // Predicated region
        $region49: #{tpu_custom_call.1} parent=27 // pred_check
          %p462 = pneg %p183
        $region50: #{tpu_custom_call.1} parent=27 // pred_check_branch
          %464 = sbr.rel (%p462) target = $region52
        $region51: #{tpu_custom_call.1} parent=27 // pred_region
          %s465 = sadd.s32 %s33, %s34
          %467 = vsyncadd %s428, 0
          %s468 = smul.addr %s465, 4
          %s469 = scalar_lea.hbm %s4, %s468
          %s471 = sshll.u32 %s431, 4
          %s472 = int_to_ptr.vmem [resolvable:$true] %s471
          %s473 = sshll.u32 %s469, 4
          %s474 = int_to_ptr.hbm [resolvable:$true] %s473
          %476 = dma.vmem_to_hbm [thread:$0]  %s472, 64, %s474, %s428
        $region52: #{tpu_custom_call.1} parent=27 // pred_fallthru
          _
      $region28: #{tpu_custom_call.1} parent=5 // pred_fallthru
        _
      %p477 = scmp.le.s32.totalorder 2, %s23
      // Predicated region
      $region53: #{tpu_custom_call.1} parent=5 // pred_check
        %p478 = pneg %p477
      $region54: #{tpu_custom_call.1} parent=5 // pred_check_branch
        %480 = sbr.rel (%p478) target = $region56
      $region55: #{tpu_custom_call.1} parent=5 // pred_region
        %s481 = ssub.s32 %s23, 2
        // Predicated region
        $region57: #{tpu_custom_call.1} parent=55 // pred_check
          %p482 = pneg %p133
        $region58: #{tpu_custom_call.1} parent=55 // pred_check_branch
          %484 = sbr.rel (%p482) target = $region60
        $region59: #{tpu_custom_call.1} parent=55 // pred_region
          %s485 = sand.u32 %s118, 1
          %s486 = scalar_lea.sflag [#allocation4], %s485
          %s487 = sand.u32 %s118, 1
          %s488 = smul.addr %s487, 4
          %s489 = scalar_lea.vmem [#allocation7], %s488
          %491 = dma.done %s486, 64
        $region60: #{tpu_custom_call.1} parent=55 // pred_fallthru
          _
        // Predicated region
        $region61: #{tpu_custom_call.1} parent=55 // pred_check
          %p492 = pneg %p161
        $region62: #{tpu_custom_call.1} parent=55 // pred_check_branch
          %494 = sbr.rel (%p492) target = $region64
        $region63: #{tpu_custom_call.1} parent=55 // pred_region
          %s495 = sand.u32 %s29, 1
          %s496 = scalar_lea.sflag [#allocation9], %s495
          %s497 = sand.u32 %s146, 1
          %s498 = smul.addr %s497, 4
          %s499 = scalar_lea.vmem [#allocation8], %s498
          %501 = dma.done %s496, 64
        $region64: #{tpu_custom_call.1} parent=55 // pred_fallthru
          _
        // Predicated region
        $region65: #{tpu_custom_call.1} parent=55 // pred_check
          %p502 = pneg %p189
        $region66: #{tpu_custom_call.1} parent=55 // pred_check_branch
          %504 = sbr.rel (%p502) target = $region68
        $region67: #{tpu_custom_call.1} parent=55 // pred_region
          %s505 = sand.u32 %s29, 1
          %s506 = scalar_lea.sflag [#allocation9], %s505
          %s507 = sand.u32 %s174, 1
          %s508 = smul.addr %s507, 4
          %s509 = scalar_lea.vmem [#allocation10], %s508
          %511 = dma.done %s506, 64
        $region68: #{tpu_custom_call.1} parent=55 // pred_fallthru
          _
      $region56: #{tpu_custom_call.1} parent=5 // pred_fallthru
        _
    $region6: #{tpu_custom_call.1} parent=1 // loop_footer
      %s27 = sadd.s32 1, %s23
    $region7: #{tpu_custom_call.1} parent=1 // loop_footer_branch
      %22 = sbr.rel target = $region3
    $region8: #{tpu_custom_call.1} parent=1 // loop_exit
      _
    %512 = vsyncpa [#allocation3], 1
    %s513 = scalar_lea.sflag [#allocation3], 1
    %514 = vsyncpa %s513, 1
    %515 = vsyncpa [#allocation6], 1
    %s516 = scalar_lea.sflag [#allocation6], 1
    %517 = vsyncpa %s516, 1
    %518 = vsyncpa [#allocation4], 1
    %s519 = scalar_lea.sflag [#allocation4], 1
    %520 = vsyncpa %s519, 1
    %521 = vsyncpa [#allocation9], 1
    %s522 = scalar_lea.sflag [#allocation9], 1
    %523 = vsyncpa %s522, 1

</llo_original>
